<compile_context>
chip_gen: v6e
topology: v6e:2x2x1
jax: 0.10.0
libtpu: 0.0.40
codegen_flags: <defaults>
</compile_context>

<pallas_src>
import functools

import jax
import jax.numpy as jnp
from jax.experimental import pallas as pl
from jax.experimental.pallas import tpu as pltpu

LANE = 128
SUBLANE = 8


# --------------------------------- kernel ------------------------------------

def _layernorm_kernel(x_ref, g_ref, o_ref, *, eps):
    # x_ref: (Bb, C, S, 128)  -- spatial on (sublane, lane); C on a free axis
    # g_ref: (1,  C, 1, 128)  -- per-channel gain, float32, lane-broadcast
    x = x_ref[...].astype(jnp.float32)
    mean = jnp.mean(x, axis=1, keepdims=True)            # C-1 VPU adds
    cen = x - mean
    var = jnp.mean(cen * cen, axis=1, keepdims=True)     # biased variance
    y = cen * jax.lax.rsqrt(var + eps) * g_ref[...]
    o_ref[...] = y.astype(o_ref.dtype)


# ------------------------------ tile selection --------------------------------

def _choose_tiles(B, C, L, itemsize, budget_bytes):
    """Pick (batch_tile Bb, sublane tile S) so one x block is ~budget_bytes."""
    row_bytes = C * LANE * itemsize          # bytes per sublane-row per batch
    if L >= SUBLANE and L % SUBLANE == 0:
        s = min(L, max(SUBLANE,
                       (budget_bytes // row_bytes) // SUBLANE * SUBLANE))
        while L % s != 0:                    # s stays a multiple of 8
            s -= SUBLANE
    else:
        s = L                                # small / ragged: full spatial dim
    bb = 1
    if s == L:                               # spatial is one tile -> fold batch
        block_bytes = C * s * LANE * itemsize
        bb = min(B, max(1, budget_bytes // block_bytes))
        while B % bb != 0:
            bb -= 1
    # keep >= 2 grid steps when possible so both v7x TensorCores get work
    if (B // bb) * (L // s) < 2 and B >= 2:
        bb = max(1, B // 2)
        while B % bb != 0:
            bb -= 1
    return bb, s


# --------------------------------- wrapper ------------------------------------

def layernorm_forward(x_nchw, g, *, block_budget_bytes=2 * 1024 * 1024):
    B, C, H, W = x_nchw.shape
    eps = 1e-5 if x_nchw.dtype == jnp.float32 else 1e-3
    hw = H * W
    itemsize = jnp.dtype(x_nchw.dtype).itemsize

    # Lane-dense layout: pad H*W up to a multiple of 128 and view it as
    # (L sublane-rows, 128 lanes).  Padded columns reduce over C independently
    # (zeros -> output zeros) and are sliced off afterwards.
    hw_pad = pl.cdiv(hw, LANE) * LANE
    L = hw_pad // LANE

    x3 = x_nchw.reshape(B, C, hw)
    if hw_pad != hw:
        x3 = jnp.pad(x3, ((0, 0), (0, 0), (0, hw_pad - hw)))
    x4 = x3.reshape(B, C, L, LANE)

    # Gain stays float32 end-to-end; pre-broadcast along lanes (tiny, resident).
    g4 = jnp.broadcast_to(g.reshape(1, C, 1, 1).astype(jnp.float32),
                          (1, C, 1, LANE))

    bb, s = _choose_tiles(B, C, L, itemsize, block_budget_bytes)
    grid = (B // bb, L // s)

    kernel = functools.partial(_layernorm_kernel, eps=eps)
    cost = pl.CostEstimate(
        flops=8 * B * C * hw_pad,
        transcendentals=B * hw_pad,
        bytes_accessed=2 * B * C * hw_pad * itemsize,
    )

    out = pl.pallas_call(
        kernel,
        out_shape=jax.ShapeDtypeStruct((B, C, L, LANE), x_nchw.dtype),
        grid_spec=pltpu.PrefetchScalarGridSpec(
            num_scalar_prefetch=0,
            grid=grid,
            in_specs=[
                pl.BlockSpec((bb, C, s, LANE), lambda b, l: (b, 0, l, 0)),
                pl.BlockSpec((1, C, 1, LANE), lambda b, l: (0, 0, 0, 0)),
            ],
            out_specs=pl.BlockSpec((bb, C, s, LANE), lambda b, l: (b, 0, l, 0)),
        ),
        compiler_params=pltpu.CompilerParams(
            dimension_semantics=("parallel", "parallel"),
            vmem_limit_bytes=32 * 1024 * 1024,   # << v7x's 64 MiB physical VMEM
        ),
        cost_estimate=cost,
    )(x4, g4)

    out = out.reshape(B, C, hw_pad)
    if hw_pad != hw:
        out = out[:, :, :hw]
    return out.reshape(B, C, H, W)


# ----------------------------- pure-JAX reference ------------------------------

def reference_layernorm(x, g):
    eps = 1e-5 if x.dtype == jnp.float32 else 1e-3
    xf = x.astype(jnp.float32)
    mean = jnp.mean(xf, axis=1, keepdims=True)
    var = jnp.mean((xf - mean) ** 2, axis=1, keepdims=True)
    return ((xf - mean) * jax.lax.rsqrt(var + eps)
            * g.astype(jnp.float32)).astype(x.dtype)


# ----------------------------------- main ---------------------------------------

if __name__ == "__main__":
    key = jax.random.PRNGKey(0)
    kx, kg, kx2, kg2 = jax.random.split(key, 4)

    # Primary small shape (matches the module: NCHW, norm over dim=1).
    B, C, H, W = 2, 4, 16, 16
    x = jax.random.normal(kx, (B, C, H, W), jnp.float32)
    g = 1.0 + 0.1 * jax.random.normal(kg, (1, C, 1, 1), jnp.float32)

    out = jax.block_until_ready(layernorm_forward(x, g))
    ref = jax.block_until_ready(reference_layernorm(x, g))
    assert out.shape == (B, C, H, W)
    assert jnp.allclose(out, ref, atol=1e-5, rtol=1e-5), (
        float(jnp.max(jnp.abs(out - ref))))

    # Second small shape exercising the multi-sublane-row path (H*W = 1024).
    B2, C2, H2, W2 = 2, 8, 32, 32
    x2 = jax.random.normal(kx2, (B2, C2, H2, W2), jnp.float32)
    g2 = 1.0 + 0.1 * jax.random.normal(kg2, (1, C2, 1, 1), jnp.float32)

    out2 = jax.block_until_ready(layernorm_forward(x2, g2))
    ref2 = jax.block_until_ready(reference_layernorm(x2, g2))
    assert out2.shape == (B2, C2, H2, W2)
    assert jnp.allclose(out2, ref2, atol=1e-5, rtol=1e-5), (
        float(jnp.max(jnp.abs(out2 - ref2))))

    print("KERNEL_OK")
</pallas_src>

<mosaic_0001>
module attributes {stable_mosaic.version = 11 : i64} {
  func.func @_layernorm_kernel(%arg0: i32, %arg1: i32, %arg2: memref<1x4x2x128xf32, #tpu.memory_space<vmem>>, %arg3: memref<1x4x1x128xf32, #tpu.memory_space<vmem>>, %arg4: memref<1x4x2x128xf32, #tpu.memory_space<vmem>>) attributes {dimension_semantics = [#tpu.dimension_semantics<parallel>, #tpu.dimension_semantics<parallel>], iteration_bounds = array<i64: 2, 1>, scalar_prefetch = 0 : i64, scratch_operands = 0 : i64, tpu.core_type = #tpu.core_type<tc>, window_params = [{transform_indices = @transform_0, window_bounds = array<i64: 1, 4, 2, 128>}, {pipeline_mode = #tpu.pipeline_mode<synchronous>, transform_indices = @transform_1, window_bounds = array<i64: 1, 4, 1, 128>}, {transform_indices = @transform_2, window_bounds = array<i64: 1, 4, 2, 128>}]} {
    %c0 = arith.constant 0 : index
    %c0_0 = arith.constant 0 : index
    %c0_1 = arith.constant 0 : index
    %c0_2 = arith.constant 0 : index
    %0 = vector.load %arg2[%c0, %c0_0, %c0_1, %c0_2] : memref<1x4x2x128xf32, #tpu.memory_space<vmem>>, vector<1x4x2x128xf32>
    %cst = arith.constant dense<0.000000e+00> : vector<1x2x128xf32>
    %1 = vector.multi_reduction <add>, %0, %cst [1] : vector<1x4x2x128xf32> to vector<1x2x128xf32>
    %2 = vector.shape_cast %1 : vector<1x2x128xf32> to vector<1x1x2x128xf32>
    %cst_3 = arith.constant 4.000000e+00 : f32
    %3 = vector.broadcast %cst_3 : f32 to vector<1x1x2x128xf32>
    %4 = arith.divf %2, %3 : vector<1x1x2x128xf32>
    %5 = vector.broadcast %4 : vector<1x1x2x128xf32> to vector<1x4x2x128xf32>
    %6 = arith.subf %0, %5 : vector<1x4x2x128xf32>
    %7 = arith.mulf %6, %6 : vector<1x4x2x128xf32>
    %cst_4 = arith.constant dense<0.000000e+00> : vector<1x2x128xf32>
    %8 = vector.multi_reduction <add>, %7, %cst_4 [1] : vector<1x4x2x128xf32> to vector<1x2x128xf32>
    %9 = vector.shape_cast %8 : vector<1x2x128xf32> to vector<1x1x2x128xf32>
    %cst_5 = arith.constant 4.000000e+00 : f32
    %10 = vector.broadcast %cst_5 : f32 to vector<1x1x2x128xf32>
    %11 = arith.divf %9, %10 : vector<1x1x2x128xf32>
    %cst_6 = arith.constant 9.99999974E-6 : f32
    %12 = vector.broadcast %cst_6 : f32 to vector<1x1x2x128xf32>
    %13 = arith.addf %11, %12 : vector<1x1x2x128xf32>
    %14 = math.rsqrt %13 : vector<1x1x2x128xf32>
    %15 = vector.broadcast %14 : vector<1x1x2x128xf32> to vector<1x4x2x128xf32>
    %16 = arith.mulf %6, %15 : vector<1x4x2x128xf32>
    %c0_7 = arith.constant 0 : index
    %c0_8 = arith.constant 0 : index
    %c0_9 = arith.constant 0 : index
    %c0_10 = arith.constant 0 : index
    %17 = vector.load %arg3[%c0_7, %c0_8, %c0_9, %c0_10] : memref<1x4x1x128xf32, #tpu.memory_space<vmem>>, vector<1x4x1x128xf32>
    %18 = vector.broadcast %17 : vector<1x4x1x128xf32> to vector<1x4x2x128xf32>
    %19 = arith.mulf %16, %18 : vector<1x4x2x128xf32>
    %c0_11 = arith.constant 0 : index
    %c0_12 = arith.constant 0 : index
    %c0_13 = arith.constant 0 : index
    %c0_14 = arith.constant 0 : index
    %20 = vector.load %arg4[%c0_11, %c0_12, %c0_13, %c0_14] : memref<1x4x2x128xf32, #tpu.memory_space<vmem>>, vector<1x4x2x128xf32>
    tpu.vector_store %arg4[%c0_11, %c0_12, %c0_13, %c0_14], %19 {strides = array<i32>} : memref<1x4x2x128xf32, #tpu.memory_space<vmem>>, vector<1x4x2x128xf32>,
    return
  }
  func.func @transform_0(%arg0: i32, %arg1: i32) -> (i32, i32, i32, i32) {
    %c0_i32 = arith.constant 0 : i32
    %c0_i32_0 = arith.constant 0 : i32
    %c0_i32_1 = arith.constant 0 : i32
    return %arg0, %c0_i32, %arg1, %c0_i32_0 : i32, i32, i32, i32
  }
  func.func @transform_1(%arg0: i32, %arg1: i32) -> (i32, i32, i32, i32) {
    %c0_i32 = arith.constant 0 : i32
    %c0_i32_0 = arith.constant 0 : i32
    %c0_i32_1 = arith.constant 0 : i32
    %c0_i32_2 = arith.constant 0 : i32
    %c0_i32_3 = arith.constant 0 : i32
    return %c0_i32, %c0_i32_0, %c0_i32_1, %c0_i32_2 : i32, i32, i32, i32
  }
  func.func @transform_2(%arg0: i32, %arg1: i32) -> (i32, i32, i32, i32) {
    %c0_i32 = arith.constant 0 : i32
    %c0_i32_0 = arith.constant 0 : i32
    %c0_i32_1 = arith.constant 0 : i32
    return %arg0, %c0_i32, %arg1, %c0_i32_0 : i32, i32, i32, i32
  }
}

</mosaic_0001>

<llo_original>
// kernel: tpu_custom_call.1
$region0: #{tpu_custom_call.1}
  #allocation0 [shape = 'u32[]', space=smem, size = 0x4, offset = 0x4, fixed_abs, tag = 'smem constant byte address 0x4 - core index']
  #allocation1 [shape = 'u32[144,128]{1,0:T(1,128)}', space=vmem, size = 0x12000, scoped, tag = 'internal scratch']
  %s0 = inlined_call_operand.hbm [shape: f32[2,4,2,128], index: 0, kind: input, shape index: {}]
  %s1 = inlined_call_operand.hbm [shape: f32[1,4,1,128], index: 1, kind: input, shape index: {}]
  %s2 = inlined_call_operand.hbm [shape: f32[2,4,2,128], index: 2, kind: output, shape index: {}]
  %s3 = sld [smem:[#allocation0]]
  $region49: #{tpu_custom_call.1} parent=0
    _
  %s5 = ssub.s32 1, %s3
  %s6 = scalar_select 0, %s5, %s3
  $region1: #{tpu_custom_call.1} parent=0
    #allocation2 [shape = 'u8[8192]{0}', space=vmem, size = 0x2000, scoped, tag = 'input window, operand 0']
    #allocation3 [shape = 's32[2]{0}', space=sflag, size = 0x8, scoped, tag = 'scoped memory for tpu_custom_call.1']
    #allocation4 [shape = 's32[2]{0}', space=sflag, size = 0x8, scoped, tag = 'scoped memory for tpu_custom_call.1']
    #allocation5 [shape = 'u8[2048]{0}', space=vmem, size = 0x800, scoped, tag = 'input window, operand 1, single buffered']
    #allocation6 [shape = 's32[1]{0}', space=sflag, size = 0x4, scoped, tag = 'scoped memory for tpu_custom_call.1']
    #allocation7 [shape = 'u8[8192]{0}', space=vmem, size = 0x2000, scoped, tag = 'output window, operand 0']
    %7 = vsyncpa [#allocation3], 0
    %s8 = scalar_lea.sflag [#allocation3], 1
    %9 = vsyncpa %s8, 0
    %10 = vsyncpa [#allocation6], 0
    %11 = vsyncpa [#allocation4], 0
    %s12 = scalar_lea.sflag [#allocation4], 1
    %13 = vsyncpa %s12, 0
    loop: start=0, step=1, limit=4
    $region2: #{tpu_custom_call.1} parent=1 // loop_pre_header
      _
    $region3: #{tpu_custom_call.1} parent=1 // loop_header
      %s15 = sphi 0, %s19
      %p16 = scmp.ge.s32.totalorder %s15, 4
      %s22 = sphi 0, %s34
      %s23 = sphi 0, %s30
      %s24 = sphi 0, %s22
      %s25 = sphi 0, %s23
      %s26 = sphi 0, %s24
      %s27 = sphi 0, %s25
      %s39 = sphi 0, %s41
      %s42 = sphi 0, %s39
      %s43 = sphi 0, %s42
      %s59 = sphi 0, %s43
      %s63 = sphi 0, %s63
      %s65 = sphi 0, %s63
      %s66 = sphi 0, %s65
      %s80 = sphi 0, %s66
      %s88 = sphi 0, %s90
      %s91 = sphi 0, %s88
      %s92 = sphi 0, %s91
      %s108 = sphi 0, %s92
    $region4: #{tpu_custom_call.1} parent=1 // loop_header_branch
      %18 = sbr.rel (%p16) target = $region8
    $region5: #{tpu_custom_call.1} parent=1 // loop_body
      %s20 = ssub.s32 %s15, 1
      %s21 = ssub.s32 %s15, 2
      %s28 = sadd.s32 1, %s23
      %p29 = scmp.ge.s32.totalorder %s28, 1
      %s30 = scalar_select %p29, 0, %s28
      %s31 = sadd.s32 1, %s22
      %s32 = scalar_select %p29, %s31, %s22
      %p33 = scmp.ge.s32.totalorder %s32, 2
      %s34 = scalar_select %p33, 0, %s32
      %s35 = ssub.s32 %s22, %s34
      %s36 = ssub.s32 %s23, %s30
      %s37 = sor.u32 %s35, %s36
      %p38 = scmp.eq.s32.totalorder %s37, 0
      %s40 = sadd.s32 %s39, 1
      %s41 = scalar_select %p38, %s39, %s40
      %p44 = pneg %p38
      %p45 = scmp.eq.s32.totalorder %s15, 1
      %p46 = por %p44, %p45
      %p47 = scmp.ne.s32.totalorder %s39, %s42
      %p48 = scmp.eq.s32.totalorder %s15, 0
      %p49 = por %p47, %p48
      %p50 = scmp.ne.s32.totalorder %s39, %s42
      %p51 = scmp.eq.s32.totalorder %s20, 1
      %p52 = por %p50, %p51
      %p53 = scmp.ne.s32.totalorder %s42, %s43
      %p54 = scmp.eq.s32.totalorder %s20, 0
      %p55 = por %p53, %p54
      %p56 = scmp.ne.s32.totalorder %s42, %s43
      %p57 = scmp.eq.s32.totalorder %s21, 1
      %p58 = por %p56, %p57
      %p60 = scmp.ne.s32.totalorder %s43, %s59
      %p61 = scmp.eq.s32.totalorder %s21, 0
      %p62 = por %p60, %p61
      %s64 = sadd.s32 %s63, 1
      %p67 = scmp.eq.s32.totalorder %s15, 1
      %p68 = scmp.ne.s32.totalorder %s63, %s65
      %p69 = scmp.eq.s32.totalorder %s15, 0
      %p70 = por %p68, %p69
      %p71 = scmp.ne.s32.totalorder %s63, %s65
      %p72 = scmp.eq.s32.totalorder %s20, 1
      %p73 = por %p71, %p72
      %p74 = scmp.ne.s32.totalorder %s65, %s66
      %p75 = scmp.eq.s32.totalorder %s20, 0
      %p76 = por %p74, %p75
      %p77 = scmp.ne.s32.totalorder %s65, %s66
      %p78 = scmp.eq.s32.totalorder %s21, 1
      %p79 = por %p77, %p78
      %p81 = scmp.ne.s32.totalorder %s66, %s80
      %p82 = scmp.eq.s32.totalorder %s21, 0
      %p83 = por %p81, %p82
      %s84 = ssub.s32 %s22, %s34
      %s85 = ssub.s32 %s23, %s30
      %s86 = sor.u32 %s84, %s85
      %p87 = scmp.eq.s32.totalorder %s86, 0
      %s89 = sadd.s32 %s88, 1
      %s90 = scalar_select %p87, %s88, %s89
      %p93 = pneg %p87
      %p94 = scmp.eq.s32.totalorder %s15, 1
      %p95 = por %p93, %p94
      %p96 = scmp.ne.s32.totalorder %s88, %s91
      %p97 = scmp.eq.s32.totalorder %s15, 0
      %p98 = por %p96, %p97
      %p99 = scmp.ne.s32.totalorder %s88, %s91
      %p100 = scmp.eq.s32.totalorder %s20, 1
      %p101 = por %p99, %p100
      %p102 = scmp.ne.s32.totalorder %s91, %s92
      %p103 = scmp.eq.s32.totalorder %s20, 0
      %p104 = por %p102, %p103
      %p105 = scmp.ne.s32.totalorder %s91, %s92
      %p106 = scmp.eq.s32.totalorder %s21, 1
      %p107 = por %p105, %p106
      %p109 = scmp.ne.s32.totalorder %s92, %s108
      %p110 = scmp.eq.s32.totalorder %s21, 0
      %p111 = por %p109, %p110
      %p112 = scmp.le.s32.totalorder 1, %s15
      %p113 = scmp.lt.s32.totalorder %s15, 3
      %p114 = pnand %p112, %p113
      %p115 = pneg %p114
      // Predicated region
      $region9: #{tpu_custom_call.1} parent=5 // pred_check
        _
      $region10: #{tpu_custom_call.1} parent=5 // pred_check_branch
        %117 = sbr.rel (%p114) target = $region12
      $region11: #{tpu_custom_call.1} parent=5 // pred_region
        %s118 = ssub.s32 %s15, 1
        // Predicated region
        $region13: #{tpu_custom_call.1} parent=11 // pred_check
          %p119 = pneg %p76
        $region14: #{tpu_custom_call.1} parent=11 // pred_check_branch
          %121 = sbr.rel (%p119) target = $region16
        $region15: #{tpu_custom_call.1} parent=11 // pred_region
          %s123 = ssub.s32 64, 64
          %124 = vsyncadd [#allocation6], %s123
          %s125 = sshll.u32 [#allocation5], 4
          %s126 = int_to_ptr.vmem [resolvable:$true] %s125
          %131 = dma.hbm_to_vmem [thread:$0]  %s1, 64, %s126, [#allocation6], 16, 16, 1
        $region16: #{tpu_custom_call.1} parent=11 // pred_fallthru
          _
      $region12: #{tpu_custom_call.1} parent=5 // pred_fallthru
        _
      %p132 = scmp.lt.s32.totalorder %s15, 2
      // Predicated region
      $region17: #{tpu_custom_call.1} parent=5 // pred_check
        %p133 = pneg %p132
      $region18: #{tpu_custom_call.1} parent=5 // pred_check_branch
        %135 = sbr.rel (%p133) target = $region20
      $region19: #{tpu_custom_call.1} parent=5 // pred_region
        // Predicated region
        $region21: #{tpu_custom_call.1} parent=19 // pred_check
          %p136 = pneg %p49
        $region22: #{tpu_custom_call.1} parent=19 // pred_check_branch
          %138 = sbr.rel (%p136) target = $region24
        $region23: #{tpu_custom_call.1} parent=19 // pred_region
          %s139 = sand.u32 %s39, 1
          %s140 = scalar_lea.sflag [#allocation3], %s139
          %s141 = sand.u32 %s39, 1
          %s142 = smul.addr %s141, 8
          %s143 = scalar_lea.vmem [#allocation2], %s142
          %s145 = ssub.s32 128, 128
          %146 = vsyncadd %s140, %s145
          %s147 = smul.addr %s22, 4
          %s148 = sadd.s32 %s23, %s147
          %s149 = smul.addr %s148, 32
          %s150 = scalar_lea.hbm %s0, %s149
          %s151 = sshll.u32 %s143, 4
          %s152 = int_to_ptr.vmem [resolvable:$true] %s151
          %157 = dma.hbm_to_vmem [thread:$0]  %s150, 128, %s152, %s140, 32, 32, 2
        $region24: #{tpu_custom_call.1} parent=19 // pred_fallthru
          _
      $region20: #{tpu_custom_call.1} parent=5 // pred_fallthru
        _
      %p158 = scmp.le.s32.totalorder 1, %s15
      %p159 = scmp.lt.s32.totalorder %s15, 3
      %p160 = pnand %p158, %p159
      %p161 = pneg %p160
      // Predicated region
      $region25: #{tpu_custom_call.1} parent=5 // pred_check
        _
      $region26: #{tpu_custom_call.1} parent=5 // pred_check_branch
        %163 = sbr.rel (%p160) target = $region28
      $region27: #{tpu_custom_call.1} parent=5 // pred_region
        %s164 = ssub.s32 %s15, 1
        %s165 = sand.u32 %s42, 1
        %s166 = scalar_lea.sflag [#allocation3], %s165
        %s167 = sand.u32 %s42, 1
        %s168 = smul.addr %s167, 8
        %s169 = scalar_lea.vmem [#allocation2], %s168
        // Predicated region
        $region29: #{tpu_custom_call.1} parent=27 // pred_check
          %p170 = pneg %p55
        $region30: #{tpu_custom_call.1} parent=27 // pred_check_branch
          %172 = sbr.rel (%p170) target = $region32
        $region31: #{tpu_custom_call.1} parent=27 // pred_region
          %173 = dma.done %s166, 128
        $region32: #{tpu_custom_call.1} parent=27 // pred_fallthru
          _
        // Predicated region
        $region33: #{tpu_custom_call.1} parent=27 // pred_check
          %p174 = pneg %p76
        $region34: #{tpu_custom_call.1} parent=27 // pred_check_branch
          %176 = sbr.rel (%p174) target = $region36
        $region35: #{tpu_custom_call.1} parent=27 // pred_region
          %177 = dma.done [#allocation6], 64
        $region36: #{tpu_custom_call.1} parent=27 // pred_fallthru
          _
        %s178 = sand.u32 %s42, 1
        %s179 = scalar_lea.sflag [#allocation3], %s178
        %s180 = sand.u32 %s42, 1
        %s181 = smul.addr %s180, 8
        %s182 = scalar_lea.vmem [#allocation2], %s181
        %p183 = pneg %p55
        %p184 = pneg %p52
        %p185 = pneg %p76
        %p186 = pneg %p73
        %p187 = pneg %p104
        %p188 = pneg %p101
        %s189 = sand.u32 %s91, 1
        %s190 = scalar_lea.sflag [#allocation4], %s189
        %s191 = sand.u32 %s91, 1
        %s192 = smul.addr %s191, 8
        %s193 = scalar_lea.vmem [#allocation7], %s192
        %v194 = vld [vmem:[%s169] sm:$0x3]
        %v195 = vld [vmem:[%s169 + $0x2] sm:$0x3]
        %v196 = vld [vmem:[%s169 + $0x4] sm:$0x3]
        %v197 = vld [vmem:[%s169 + $0x6] sm:$0x3]
        %vm198 = vcmask 1041408
        %v199 = vsel %vm198, %v194, 0.0
        %v200 = vsel %vm198, %v195, 0.0
        %v201 = vadd.f32 %v199, %v200
        %v202 = vsel %vm198, %v196, 0.0
        %v203 = vadd.f32 %v201, %v202
        %v204 = vsel %vm198, %v197, 0.0
        %v205 = vadd.f32 %v203, %v204
        %v206 = vrcp.pop 4.0
        %v207 = vmul.f32 %v205, %v206
        %v208 = vsub.f32 %v194, %v207
        %v209 = vsub.f32 %v195, %v207
        %v210 = vsub.f32 %v196, %v207
        %v211 = vsub.f32 %v197, %v207
        %v212 = vmul.f32 %v208, %v208
        %v213 = vmul.f32 %v209, %v209
        %v214 = vmul.f32 %v210, %v210
        %v215 = vmul.f32 %v211, %v211
        %v216 = vsel %vm198, %v212, 0.0
        %v217 = vsel %vm198, %v213, 0.0
        %v218 = vadd.f32 %v216, %v217
        %v219 = vsel %vm198, %v214, 0.0
        %v220 = vadd.f32 %v218, %v219
        %v221 = vsel %vm198, %v215, 0.0
        %v222 = vadd.f32 %v220, %v221
        %v223 = vmul.f32 %v222, %v206
        %v224 = vadd.f32 %v223, 1e-05
        %v225 = vrsqrt.pop %v224
        %v226 = vmul.f32 %v208, %v225
        %v227 = vmul.f32 %v209, %v225
        %v228 = vmul.f32 %v210, %v225
        %v229 = vmul.f32 %v211, %v225
        %v230 = vld [vmem:[#allocation5] sm:$0x1]
        %v231 = vld [vmem:[#allocation5 + $0x1] sm:$0x1]
        %v232 = vld [vmem:[#allocation5 + $0x2] sm:$0x1]
        %v233 = vld [vmem:[#allocation5 + $0x3] sm:$0x1]
        %v238 = vlaneseq
        %v239 = vshrl.u32 %v238, 7
        %v240 = vsub.s32 0, %v239
        %v241 = vrot.slane %v230, %v240
        %v242 = vlaneseq
        %v243 = vshrl.u32 %v242, 7
        %v244 = vsub.s32 0, %v243
        %v245 = vrot.slane %v231, %v244
        %v246 = vlaneseq
        %v247 = vshrl.u32 %v246, 7
        %v248 = vsub.s32 0, %v247
        %v249 = vrot.slane %v232, %v248
        %v250 = vlaneseq
        %v251 = vshrl.u32 %v250, 7
        %v252 = vsub.s32 0, %v251
        %v253 = vrot.slane %v233, %v252
        %v258 = vmul.f32 %v226, %v241
        %v259 = vmul.f32 %v227, %v245
        %v260 = vmul.f32 %v228, %v249
        %v261 = vmul.f32 %v229, %v253
        %262 = vst [vmem:[%s193] sm:$0x3] %v258
        %263 = vst [vmem:[%s193 + $0x2] sm:$0x3] %v259
        %264 = vst [vmem:[%s193 + $0x4] sm:$0x3] %v260
        %265 = vst [vmem:[%s193 + $0x6] sm:$0x3] %v261
        %s266 = sand.u32 %s91, 1
        %s267 = scalar_lea.sflag [#allocation4], %s266
        %s268 = sand.u32 %s91, 1
        %s269 = smul.addr %s268, 8
        %s270 = scalar_lea.vmem [#allocation7], %s269
        // Predicated region
        $region37: #{tpu_custom_call.1} parent=27 // pred_check
          %p271 = pneg %p101
        $region38: #{tpu_custom_call.1} parent=27 // pred_check_branch
          %273 = sbr.rel (%p271) target = $region40
        $region39: #{tpu_custom_call.1} parent=27 // pred_region
          %s275 = ssub.s32 128, 128
          %276 = vsyncadd %s267, %s275
          %s277 = smul.addr %s24, 4
          %s278 = sadd.s32 %s25, %s277
          %s279 = smul.addr %s278, 32
          %s280 = scalar_lea.hbm %s2, %s279
          %s281 = sshll.u32 %s270, 4
          %s282 = int_to_ptr.vmem [resolvable:$true] %s281
          %287 = dma.vmem_to_hbm [thread:$0]  %s282, 128, %s280, %s267, 32, 32, 2
        $region40: #{tpu_custom_call.1} parent=27 // pred_fallthru
          _
      $region28: #{tpu_custom_call.1} parent=5 // pred_fallthru
        _
      %p288 = scmp.le.s32.totalorder 2, %s15
      // Predicated region
      $region41: #{tpu_custom_call.1} parent=5 // pred_check
        %p289 = pneg %p288
      $region42: #{tpu_custom_call.1} parent=5 // pred_check_branch
        %291 = sbr.rel (%p289) target = $region44
      $region43: #{tpu_custom_call.1} parent=5 // pred_region
        %s292 = ssub.s32 %s15, 2
        // Predicated region
        $region45: #{tpu_custom_call.1} parent=43 // pred_check
          %p293 = pneg %p107
        $region46: #{tpu_custom_call.1} parent=43 // pred_check_branch
          %295 = sbr.rel (%p293) target = $region48
        $region47: #{tpu_custom_call.1} parent=43 // pred_region
          %s296 = sand.u32 %s92, 1
          %s297 = scalar_lea.sflag [#allocation4], %s296
          %s298 = sand.u32 %s92, 1
          %s299 = smul.addr %s298, 8
          %s300 = scalar_lea.vmem [#allocation7], %s299
          %301 = dma.done %s297, 128
        $region48: #{tpu_custom_call.1} parent=43 // pred_fallthru
          _
      $region44: #{tpu_custom_call.1} parent=5 // pred_fallthru
        _
    $region6: #{tpu_custom_call.1} parent=1 // loop_footer
      %s19 = sadd.s32 1, %s15
    $region7: #{tpu_custom_call.1} parent=1 // loop_footer_branch
      %14 = sbr.rel target = $region3
    $region8: #{tpu_custom_call.1} parent=1 // loop_exit
      _
    %302 = vsyncpa [#allocation3], 1
    %s303 = scalar_lea.sflag [#allocation3], 1
    %304 = vsyncpa %s303, 1
    %305 = vsyncpa [#allocation6], 1
    %306 = vsyncpa [#allocation4], 1
    %s307 = scalar_lea.sflag [#allocation4], 1
    %308 = vsyncpa %s307, 1

</llo_original>
